<compile_context>
chip_gen: v7x
topology: tpu7x:2x2x1
jax: 0.10.0
libtpu: 0.0.40
codegen_flags: <defaults>
</compile_context>

<pallas_src>
import functools

import jax
import jax.numpy as jnp
from jax.experimental import pallas as pl
from jax.experimental.pallas import tpu as pltpu


def detect_kernel(x_ref, w_ref, b_ref, rc_ref, *out_refs,
                  stride, width, tm, need_raw, compute_dtype, raw_dtype):
    # x_ref:  (1, C, TM)  activations in native dtype (NCHW reshaped); cast here
    # w_ref:  (N, C)      bf16 1x1-conv weight, rows n = a*no + o
    # b_ref:  (N, 1)      f32 conv bias
    # rc_ref: (N, 8)      f32 per-row constants:
    #                     [sel_x, sel_y, is_xy, is_wh, anchor*stride, 0, 0, 0]
    # out_refs: (raw_ref?, dec_ref), each block (1, N, TM)
    if need_raw:
        raw_ref, dec_ref = out_refs
    else:
        dec_ref, = out_refs

    xv = x_ref[0]
    if xv.dtype != compute_dtype:
        xv = xv.astype(compute_dtype)        # in-kernel cast: no extra HBM pass
    conv = jnp.dot(w_ref[...], xv,
                   preferred_element_type=jnp.float32) + b_ref[...]
    if need_raw:
        raw_ref[0] = conv.astype(raw_dtype)  # full-tile, lane-dense store

    # Per-spatial-column grid offsets computed in-kernel (no streamed array).
    # +0.5 before the divide guards against reciprocal-rounding at exact
    # multiples of `width` (TPU float divide is recip+refine, not exact).
    col0 = pl.program_id(1) * tm
    flat = (col0 + jax.lax.broadcasted_iota(jnp.int32, (1, tm), 1)
            ).astype(jnp.float32)
    gy = jnp.floor((flat + 0.5) / float(width))
    gx = flat - gy * float(width)
    gx = gx - 0.5                            # (1, TM)
    gy = gy - 0.5

    s = jax.nn.sigmoid(conv)                 # f32 elementwise (v5e-safe)
    sel_x = rc_ref[:, 0:1]                   # (N, 1)
    sel_y = rc_ref[:, 1:2]
    is_xy = rc_ref[:, 2:3]
    is_wh = rc_ref[:, 3:4]
    anch = rc_ref[:, 4:5]                    # anchor*stride at o==2/3, else 1

    s2 = s * 2.0
    xy = (s2 + gx * sel_x + gy * sel_y) * stride
    wh = (s2 * s2) * anch
    dec_ref[0] = is_xy * xy + is_wh * wh + (1.0 - is_xy - is_wh) * s


def _choose_tm(hw, batch, col_bytes):
    """Spatial tile: divides hw exactly, multiple of 128 (or the full extent).

    Prefers the largest tile that fits an explicit VMEM budget (sized with
    v7x's 64 MiB in mind) and keeps >= 2 grid steps when batch == 1 so both
    v7x TensorCores get work.
    """
    if hw % 128 != 0:
        # TODO(synk): in-kernel remainder masking for spatial sizes with no
        # 128-multiple divisor; a single full-extent block is correct but can
        # be VMEM-heavy for unusually large odd sizes.
        return hw
    vmem_cap = 24 * 1024 * 1024
    cap_cols = max(128, vmem_cap // max(1, col_bytes))
    best = 128
    tm = 128
    while tm <= hw:
        if hw % tm == 0 and tm <= cap_cols:
            if not (batch == 1 and tm == hw and hw > 128):
                best = tm
        tm += 128
    return best


def detect_level(x_nchw, weight, bias, anchors_lvl, stride, na, no,
                 compute_dtype=jnp.bfloat16, raw_dtype=jnp.bfloat16,
                 need_raw=True):
    """One detection level: 1x1 conv + sigmoid + box decode (Pallas kernel)."""
    B, C, H, W = x_nchw.shape
    N = na * no
    HW = H * W

    x_item = jnp.dtype(x_nchw.dtype).itemsize
    raw_item = jnp.dtype(raw_dtype).itemsize if need_raw else 0
    # Per spatial column: double-buffered blocked streams + elementwise temps.
    col_bytes = 2 * (C * x_item + N * raw_item + N * 4) + 8 * N * 4
    TM = _choose_tm(HW, B, col_bytes)
    n_m = HW // TM

    # Activations stay in native dtype/storage: NCHW -> (B, C, H*W) is a pure
    # reshape (no transpose pass, no cast pass); the bf16 cast is in-kernel.
    x_rows = x_nchw.reshape(B, C, HW)

    # 1x1 conv params, rows n = a*no + o (no padding: outputs store N rows).
    w_mat = weight.reshape(N, C).astype(compute_dtype)
    b_col = bias.astype(jnp.float32).reshape(N, 1)

    # Per-row decode constants packed into one small lane-friendly array.
    n_idx = jnp.arange(N)
    o = n_idx % no
    a = n_idx // no
    aw = anchors_lvl[a, 0] * stride
    ah = anchors_lvl[a, 1] * stride
    rc = jnp.zeros((N, 8), jnp.float32)
    rc = rc.at[:, 0].set((o == 0).astype(jnp.float32))
    rc = rc.at[:, 1].set((o == 1).astype(jnp.float32))
    rc = rc.at[:, 2].set((o < 2).astype(jnp.float32))
    rc = rc.at[:, 3].set(((o == 2) | (o == 3)).astype(jnp.float32))
    rc = rc.at[:, 4].set(jnp.where(o == 2, aw, jnp.where(o == 3, ah, 1.0)))

    kernel = functools.partial(
        detect_kernel, stride=float(stride), width=W, tm=TM,
        need_raw=need_raw, compute_dtype=compute_dtype, raw_dtype=raw_dtype)

    out_shape = []
    out_specs = []
    if need_raw:
        out_shape.append(jax.ShapeDtypeStruct((B, N, HW), raw_dtype))
        out_specs.append(pl.BlockSpec((1, N, TM), lambda b, m: (b, 0, m)))
    out_shape.append(jax.ShapeDtypeStruct((B, N, HW), jnp.float32))
    out_specs.append(pl.BlockSpec((1, N, TM), lambda b, m: (b, 0, m)))

    params_bytes = N * C * jnp.dtype(compute_dtype).itemsize + N * 4 + N * 32
    vmem_limit = int(min(64 << 20,
                         max(32 << 20,
                             TM * col_bytes + 2 * params_bytes + (4 << 20))))

    outs = pl.pallas_call(
        kernel,
        out_shape=tuple(out_shape),
        grid=(B, n_m),
        in_specs=[
            pl.BlockSpec((1, C, TM), lambda b, m: (b, 0, m)),
            pl.BlockSpec((N, C), lambda b, m: (0, 0)),
            pl.BlockSpec((N, 1), lambda b, m: (0, 0)),
            pl.BlockSpec((N, 8), lambda b, m: (0, 0)),
        ],
        out_specs=tuple(out_specs),
        compiler_params=pltpu.CompilerParams(
            dimension_semantics=("parallel", "parallel"),
            vmem_limit_bytes=vmem_limit),
    )(x_rows, w_mat, b_col, rc)

    if need_raw:
        raw, dec = outs
        # Channel-only permute (N = 60 rows, done on the bf16 array).
        x_perm = raw.reshape(B, na, no, H, W).transpose(0, 1, 3, 4, 2)
    else:
        dec = outs[0]
        x_perm = None
    z = dec.reshape(B, na, no, HW).transpose(0, 1, 3, 2).reshape(B, na * HW, no)
    return x_perm, z


def tt_yolov5_detect(xs, weights, biases, anchors_arr, strides, na, no,
                     compute_dtype=jnp.bfloat16, raw_dtype=jnp.bfloat16,
                     need_raw=True):
    """Inference forward (training=False, export=False): returns (z_cat, x_list).

    With need_raw=False the raw conv outputs are skipped entirely (pure-NMS
    inference path; roughly halves the head's HBM traffic) and x_list is None.
    """
    x_out, z = [], []
    for i in range(len(xs)):
        xp, zi = detect_level(xs[i], weights[i], biases[i], anchors_arr[i],
                              strides[i], na, no, compute_dtype=compute_dtype,
                              raw_dtype=raw_dtype, need_raw=need_raw)
        x_out.append(xp)
        z.append(zi)
    z_cat = jnp.concatenate(z, axis=1)
    return (z_cat, x_out) if need_raw else (z_cat, None)


# ---------------- pure-JAX reference (mirrors the PyTorch forward) -----------
def reference_level(x_nchw, weight, bias, anchors_lvl, stride, na, no,
                    compute_dtype=jnp.bfloat16):
    B, C, H, W = x_nchw.shape
    conv = jnp.einsum("bchw,oc->bohw",
                      x_nchw.astype(compute_dtype),
                      weight.reshape(na * no, C).astype(compute_dtype),
                      preferred_element_type=jnp.float32)
    conv = conv + bias[None, :, None, None]
    x = conv.reshape(B, na, no, H, W).transpose(0, 1, 3, 4, 2)  # (B,na,H,W,no)
    s = jax.nn.sigmoid(x)
    yv, xv = jnp.meshgrid(jnp.arange(H, dtype=jnp.float32),
                          jnp.arange(W, dtype=jnp.float32), indexing="ij")
    grid = jnp.stack((xv, yv), 2)[None, None] - 0.5              # (1,1,H,W,2)
    anchor_grid = (anchors_lvl * stride).reshape(1, na, 1, 1, 2)
    xy = (s[..., 0:2] * 2.0 + grid) * stride
    wh = (s[..., 2:4] * 2.0) ** 2 * anchor_grid
    conf = s[..., 4:]
    y = jnp.concatenate((xy, wh, conf), axis=-1)
    return x, y.reshape(B, na * H * W, no)


if __name__ == "__main__":
    key = jax.random.PRNGKey(0)

    nc = 15
    no = nc + 5                       # 20
    anchors = ((10, 13, 16, 30, 33, 23),
               (30, 61, 62, 45, 59, 119),
               (116, 90, 156, 198, 373, 326))
    nl = len(anchors)
    na = len(anchors[0]) // 2         # 3
    anchors_arr = jnp.asarray(anchors, jnp.float32).reshape(nl, na, 2)
    ch = (16, 32, 64)
    strides = (8.0, 16.0, 32.0)
    spatial = (8, 4, 2)
    B = 2

    keys = jax.random.split(key, 3 * nl)
    xs, weights, biases = [], [], []
    for i in range(nl):
        kx, kw, kb = keys[3 * i], keys[3 * i + 1], keys[3 * i + 2]
        xs.append(jax.random.normal(kx, (B, ch[i], spatial[i], spatial[i]),
                                    jnp.float32))
        # 1x1 conv params: (na*no, C, 1, 1) weight + (na*no,) bias
        weights.append(jax.random.normal(kw, (na * no, ch[i], 1, 1),
                                         jnp.float32) * 0.05)
        biases.append(jax.random.normal(kb, (na * no,), jnp.float32) * 0.05)

    # Full forward (matches the PyTorch module's (z_cat, x) return).
    z_cat, x_out = tt_yolov5_detect(xs, weights, biases, anchors_arr,
                                    strides, na, no)
    jax.block_until_ready(z_cat)

    # Verify against the pure-JAX mirror of the PyTorch forward (same bf16
    # matmul-input quantization as the kernel; everything else in f32; the raw
    # x outputs additionally carry the bf16 store quantization).
    z_ref = []
    ok = True
    for i in range(nl):
        xr, zr = reference_level(xs[i], weights[i], biases[i],
                                 anchors_arr[i], strides[i], na, no)
        ok = ok and (x_out[i].shape == xr.shape)
        ok = ok and bool(jnp.allclose(x_out[i].astype(jnp.float32), xr,
                                      rtol=1e-2, atol=1e-2))
        z_ref.append(zr)
    z_ref_cat = jnp.concatenate(z_ref, axis=1)
    ok = ok and (z_cat.shape == z_ref_cat.shape)
    ok = ok and bool(jnp.allclose(z_cat, z_ref_cat, rtol=1e-2, atol=1e-2))

    # Also exercise the byte-saving pure-inference path (no raw conv output).
    z_fast, x_none = tt_yolov5_detect(xs, weights, biases, anchors_arr,
                                      strides, na, no, need_raw=False)
    jax.block_until_ready(z_fast)
    ok = ok and (x_none is None)
    ok = ok and bool(jnp.allclose(z_fast, z_ref_cat, rtol=1e-2, atol=1e-2))

    assert ok, "Pallas detect head does not match reference"
    print("KERNEL_OK")
</pallas_src>

<mosaic_0001>
module attributes {stable_mosaic.version = 11 : i64} {
  func.func @detect_kernel(%arg0: i32, %arg1: i32, %arg2: memref<1x16x64xf32, #tpu.memory_space<vmem>>, %arg3: memref<60x16xbf16, #tpu.memory_space<vmem>>, %arg4: memref<60x1xf32, #tpu.memory_space<vmem>>, %arg5: memref<60x8xf32, #tpu.memory_space<vmem>>, %arg6: memref<1x60x64xbf16, #tpu.memory_space<vmem>>, %arg7: memref<1x60x64xf32, #tpu.memory_space<vmem>>) attributes {dimension_semantics = [#tpu.dimension_semantics<parallel>, #tpu.dimension_semantics<parallel>], iteration_bounds = array<i64: 2, 1>, scalar_prefetch = 0 : i64, scratch_operands = 0 : i64, tpu.core_type = #tpu.core_type<tc>, window_params = [{transform_indices = @transform_0, window_bounds = array<i64: 1, 16, 64>}, {pipeline_mode = #tpu.pipeline_mode<synchronous>, transform_indices = @transform_1, window_bounds = array<i64: 60, 16>}, {pipeline_mode = #tpu.pipeline_mode<synchronous>, transform_indices = @transform_2, window_bounds = array<i64: 60, 1>}, {pipeline_mode = #tpu.pipeline_mode<synchronous>, transform_indices = @transform_3, window_bounds = array<i64: 60, 8>}, {transform_indices = @transform_4, window_bounds = array<i64: 1, 60, 64>}, {transform_indices = @transform_5, window_bounds = array<i64: 1, 60, 64>}]} {
    %c0 = arith.constant 0 : index
    %c0_0 = arith.constant 0 : index
    %c0_1 = arith.constant 0 : index
    %0 = vector.load %arg2[%c0, %c0_0, %c0_1] : memref<1x16x64xf32, #tpu.memory_space<vmem>>, vector<1x16x64xf32>
    %1 = vector.shape_cast %0 : vector<1x16x64xf32> to vector<16x64xf32>
    %2 = arith.truncf %1 : vector<16x64xf32> to vector<16x64xbf16>
    %c0_2 = arith.constant 0 : index
    %c0_3 = arith.constant 0 : index
    %3 = vector.load %arg3[%c0_2, %c0_3] : memref<60x16xbf16, #tpu.memory_space<vmem>>, vector<60x16xbf16>
    %cst = arith.constant dense<0.000000e+00> : vector<60x64xf32>
    %4 = tpu.matmul %3, %2, %cst {dimension_numbers = #tpu.dot_dimension_numbers<[1], [0], [0], [1], [0, 0, 1, 1], [], []>} : vector<60x16xbf16>, vector<16x64xbf16>, vector<60x64xf32> -> vector<60x64xf32>
    %c0_4 = arith.constant 0 : index
    %c0_5 = arith.constant 0 : index
    %5 = vector.load %arg4[%c0_4, %c0_5] : memref<60x1xf32, #tpu.memory_space<vmem>>, vector<60x1xf32>
    %6 = vector.broadcast %5 : vector<60x1xf32> to vector<60x64xf32>
    %7 = arith.addf %4, %6 : vector<60x64xf32>
    %8 = arith.truncf %7 : vector<60x64xf32> to vector<60x64xbf16>
    %c0_6 = arith.constant 0 : index
    %c0_7 = arith.constant 0 : index
    %c0_8 = arith.constant 0 : index
    %9 = vector.load %arg6[%c0_6, %c0_7, %c0_8] : memref<1x60x64xbf16, #tpu.memory_space<vmem>>, vector<1x60x64xbf16>
    %10 = vector.shape_cast %9 : vector<1x60x64xbf16> to vector<60x64xbf16>
    %11 = vector.shape_cast %8 : vector<60x64xbf16> to vector<1x60x64xbf16>
    tpu.vector_store %arg6[%c0_6, %c0_7, %c0_8], %11 {strides = array<i32>} : memref<1x60x64xbf16, #tpu.memory_space<vmem>>, vector<1x60x64xbf16>,
    %c64_i32 = arith.constant 64 : i32
    %12 = arith.muli %arg1, %c64_i32 : i32
    %13 = tpu.iota {dimensions = array<i32: 1>} : vector<1x64xi32>
    %14 = vector.broadcast %12 : i32 to vector<1x64xi32>
    %15 = arith.addi %14, %13 : vector<1x64xi32>
    %16 = arith.sitofp %15 : vector<1x64xi32> to vector<1x64xf32>
    %cst_9 = arith.constant 5.000000e-01 : f32
    %17 = vector.broadcast %cst_9 : f32 to vector<1x64xf32>
    %18 = arith.addf %16, %17 : vector<1x64xf32>
    %cst_10 = arith.constant 8.000000e+00 : f32
    %19 = vector.broadcast %cst_10 : f32 to vector<1x64xf32>
    %20 = arith.divf %18, %19 : vector<1x64xf32>
    %21 = math.floor %20 : vector<1x64xf32>
    %cst_11 = arith.constant 8.000000e+00 : f32
    %22 = vector.broadcast %cst_11 : f32 to vector<1x64xf32>
    %23 = arith.mulf %21, %22 : vector<1x64xf32>
    %24 = arith.subf %16, %23 : vector<1x64xf32>
    %cst_12 = arith.constant 5.000000e-01 : f32
    %25 = vector.broadcast %cst_12 : f32 to vector<1x64xf32>
    %26 = arith.subf %24, %25 : vector<1x64xf32>
    %cst_13 = arith.constant 5.000000e-01 : f32
    %27 = vector.broadcast %cst_13 : f32 to vector<1x64xf32>
    %28 = arith.subf %21, %27 : vector<1x64xf32>
    %29 = arith.negf %7 : vector<60x64xf32>
    %30 = math.exp %29 : vector<60x64xf32>
    %cst_14 = arith.constant 1.000000e+00 : f32
    %31 = vector.broadcast %cst_14 : f32 to vector<60x64xf32>
    %32 = arith.addf %31, %30 : vector<60x64xf32>
    %33 = arith.divf %31, %32 : vector<60x64xf32>
    %c0_15 = arith.constant 0 : index
    %c0_16 = arith.constant 0 : index
    %34 = vector.load %arg5[%c0_15, %c0_16] : memref<60x8xf32, #tpu.memory_space<vmem>>, vector<60x1xf32>
    %c0_17 = arith.constant 0 : index
    %c1 = arith.constant 1 : index
    %35 = vector.load %arg5[%c0_17, %c1] : memref<60x8xf32, #tpu.memory_space<vmem>>, vector<60x1xf32>
    %c0_18 = arith.constant 0 : index
    %c2 = arith.constant 2 : index
    %36 = vector.load %arg5[%c0_18, %c2] : memref<60x8xf32, #tpu.memory_space<vmem>>, vector<60x1xf32>
    %c0_19 = arith.constant 0 : index
    %c3 = arith.constant 3 : index
    %37 = vector.load %arg5[%c0_19, %c3] : memref<60x8xf32, #tpu.memory_space<vmem>>, vector<60x1xf32>
    %c0_20 = arith.constant 0 : index
    %c4 = arith.constant 4 : index
    %38 = vector.load %arg5[%c0_20, %c4] : memref<60x8xf32, #tpu.memory_space<vmem>>, vector<60x1xf32>
    %cst_21 = arith.constant 2.000000e+00 : f32
    %39 = vector.broadcast %cst_21 : f32 to vector<60x64xf32>
    %40 = arith.mulf %33, %39 : vector<60x64xf32>
    %41 = vector.broadcast %26 : vector<1x64xf32> to vector<60x64xf32>
    %42 = vector.broadcast %34 : vector<60x1xf32> to vector<60x64xf32>
    %43 = arith.mulf %41, %42 : vector<60x64xf32>
    %44 = arith.addf %40, %43 : vector<60x64xf32>
    %45 = vector.broadcast %28 : vector<1x64xf32> to vector<60x64xf32>
    %46 = vector.broadcast %35 : vector<60x1xf32> to vector<60x64xf32>
    %47 = arith.mulf %45, %46 : vector<60x64xf32>
    %48 = arith.addf %44, %47 : vector<60x64xf32>
    %cst_22 = arith.constant 8.000000e+00 : f32
    %49 = vector.broadcast %cst_22 : f32 to vector<60x64xf32>
    %50 = arith.mulf %48, %49 : vector<60x64xf32>
    %51 = arith.mulf %40, %40 : vector<60x64xf32>
    %52 = vector.broadcast %38 : vector<60x1xf32> to vector<60x64xf32>
    %53 = arith.mulf %51, %52 : vector<60x64xf32>
    %54 = vector.broadcast %36 : vector<60x1xf32> to vector<60x64xf32>
    %55 = arith.mulf %54, %50 : vector<60x64xf32>
    %56 = vector.broadcast %37 : vector<60x1xf32> to vector<60x64xf32>
    %57 = arith.mulf %56, %53 : vector<60x64xf32>
    %58 = arith.addf %55, %57 : vector<60x64xf32>
    %cst_23 = arith.constant 1.000000e+00 : f32
    %59 = vector.broadcast %cst_23 : f32 to vector<60x1xf32>
    %60 = arith.subf %59, %36 : vector<60x1xf32>
    %61 = arith.subf %60, %37 : vector<60x1xf32>
    %62 = vector.broadcast %61 : vector<60x1xf32> to vector<60x64xf32>
    %63 = arith.mulf %62, %33 : vector<60x64xf32>
    %64 = arith.addf %58, %63 : vector<60x64xf32>
    %c0_24 = arith.constant 0 : index
    %c0_25 = arith.constant 0 : index
    %c0_26 = arith.constant 0 : index
    %65 = vector.load %arg7[%c0_24, %c0_25, %c0_26] : memref<1x60x64xf32, #tpu.memory_space<vmem>>, vector<1x60x64xf32>
    %66 = vector.shape_cast %65 : vector<1x60x64xf32> to vector<60x64xf32>
    %67 = vector.shape_cast %64 : vector<60x64xf32> to vector<1x60x64xf32>
    tpu.vector_store %arg7[%c0_24, %c0_25, %c0_26], %67 {strides = array<i32>} : memref<1x60x64xf32, #tpu.memory_space<vmem>>, vector<1x60x64xf32>,
    return
  }
  func.func @transform_0(%arg0: i32, %arg1: i32) -> (i32, i32, i32) {
    %c0_i32 = arith.constant 0 : i32
    %c0_i32_0 = arith.constant 0 : i32
    return %arg0, %c0_i32, %arg1 : i32, i32, i32
  }
  func.func @transform_1(%arg0: i32, %arg1: i32) -> (i32, i32) {
    %c0_i32 = arith.constant 0 : i32
    %c0_i32_0 = arith.constant 0 : i32
    %c0_i32_1 = arith.constant 0 : i32
    return %c0_i32, %c0_i32_0 : i32, i32
  }
  func.func @transform_2(%arg0: i32, %arg1: i32) -> (i32, i32) {
    %c0_i32 = arith.constant 0 : i32
    %c0_i32_0 = arith.constant 0 : i32
    %c0_i32_1 = arith.constant 0 : i32
    return %c0_i32, %c0_i32_0 : i32, i32
  }
  func.func @transform_3(%arg0: i32, %arg1: i32) -> (i32, i32) {
    %c0_i32 = arith.constant 0 : i32
    %c0_i32_0 = arith.constant 0 : i32
    %c0_i32_1 = arith.constant 0 : i32
    return %c0_i32, %c0_i32_0 : i32, i32
  }
  func.func @transform_4(%arg0: i32, %arg1: i32) -> (i32, i32, i32) {
    %c0_i32 = arith.constant 0 : i32
    %c0_i32_0 = arith.constant 0 : i32
    return %arg0, %c0_i32, %arg1 : i32, i32, i32
  }
  func.func @transform_5(%arg0: i32, %arg1: i32) -> (i32, i32, i32) {
    %c0_i32 = arith.constant 0 : i32
    %c0_i32_0 = arith.constant 0 : i32
    return %arg0, %c0_i32, %arg1 : i32, i32, i32
  }
}

</mosaic_0001>

<llo_original>
// kernel: tpu_custom_call.1
$region0: #{tpu_custom_call.1}
  #allocation0 [shape = 'u32[]', space=smem, size = 0x4, offset = 0x4, fixed_abs, tag = 'smem constant byte address 0x4 - core index']
  #allocation1 [shape = 'u32[144,128]{1,0:T(1,128)}', space=vmem, size = 0x12000, scoped, tag = 'internal scratch']
  %s0 = inlined_call_operand.vmem [shape: f32[2,16,64], index: 0, kind: input, shape index: {}]
  %s1 = inlined_call_operand.vmem [shape: bf16[60,16], index: 1, kind: input, shape index: {}]
  %s2 = inlined_call_operand.vmem [shape: f32[60,1], index: 2, kind: input, shape index: {}]
  %s3 = inlined_call_operand.vmem [shape: f32[60,8], index: 3, kind: input, shape index: {}]
  %s4 = inlined_call_operand.vmem [shape: bf16[2,60,64], index: 4, kind: output, shape index: {0}]
  %s5 = inlined_call_operand.vmem [shape: f32[2,60,64], index: 5, kind: output, shape index: {1}]
  %6 = xla_tuple %s4, %s5
  %s7 = sld [smem:[#allocation0]]
  $region57: #{tpu_custom_call.1} parent=0
    _
  %s9 = ssub.s32 1, %s7
  %s10 = scalar_select 0, %s9, %s7
  loop: start=0, step=1, limit=4
  $region2: #{tpu_custom_call.1} parent=0 // loop_pre_header
    _
  $region3: #{tpu_custom_call.1} parent=0 // loop_header
    %s12 = sphi 0, %s16
    %p13 = scmp.ge.s32.totalorder %s12, 4
    %s19 = sphi 0, %s31
    %s20 = sphi 0, %s27
    %s21 = sphi 0, %s19
    %s22 = sphi 0, %s20
    %s23 = sphi 0, %s21
    %s24 = sphi 0, %s22
    %s36 = sphi 0, %s38
    %s39 = sphi 0, %s36
    %s40 = sphi 0, %s39
    %s56 = sphi 0, %s40
    %s60 = sphi 0, %s60
    %s62 = sphi 0, %s60
    %s63 = sphi 0, %s62
    %s77 = sphi 0, %s63
    %s81 = sphi 0, %s81
    %s83 = sphi 0, %s81
    %s84 = sphi 0, %s83
    %s98 = sphi 0, %s84
    %s102 = sphi 0, %s102
    %s104 = sphi 0, %s102
    %s105 = sphi 0, %s104
    %s119 = sphi 0, %s105
    %s127 = sphi 0, %s129
    %s130 = sphi 0, %s127
    %s131 = sphi 0, %s130
    %s147 = sphi 0, %s131
    %s155 = sphi 0, %s157
    %s158 = sphi 0, %s155
    %s159 = sphi 0, %s158
    %s175 = sphi 0, %s159
  $region4: #{tpu_custom_call.1} parent=0 // loop_header_branch
    %15 = sbr.rel (%p13) target = $region8
  $region5: #{tpu_custom_call.1} parent=0 // loop_body
    %s17 = ssub.s32 %s12, 1
    %s18 = ssub.s32 %s12, 2
    %s25 = sadd.s32 1, %s20
    %p26 = scmp.ge.s32.totalorder %s25, 1
    %s27 = scalar_select %p26, 0, %s25
    %s28 = sadd.s32 1, %s19
    %s29 = scalar_select %p26, %s28, %s19
    %p30 = scmp.ge.s32.totalorder %s29, 2
    %s31 = scalar_select %p30, 0, %s29
    %s32 = ssub.s32 %s19, %s31
    %s33 = ssub.s32 %s20, %s27
    %s34 = sor.u32 %s32, %s33
    %p35 = scmp.eq.s32.totalorder %s34, 0
    %s37 = sadd.s32 %s36, 1
    %s38 = scalar_select %p35, %s36, %s37
    %p41 = pneg %p35
    %p42 = scmp.eq.s32.totalorder %s12, 1
    %p43 = por %p41, %p42
    %p44 = scmp.ne.s32.totalorder %s36, %s39
    %p45 = scmp.eq.s32.totalorder %s12, 0
    %p46 = por %p44, %p45
    %p47 = scmp.ne.s32.totalorder %s36, %s39
    %p48 = scmp.eq.s32.totalorder %s17, 1
    %p49 = por %p47, %p48
    %p50 = scmp.ne.s32.totalorder %s39, %s40
    %p51 = scmp.eq.s32.totalorder %s17, 0
    %p52 = por %p50, %p51
    %p53 = scmp.ne.s32.totalorder %s39, %s40
    %p54 = scmp.eq.s32.totalorder %s18, 1
    %p55 = por %p53, %p54
    %p57 = scmp.ne.s32.totalorder %s40, %s56
    %p58 = scmp.eq.s32.totalorder %s18, 0
    %p59 = por %p57, %p58
    %s61 = sadd.s32 %s60, 1
    %p64 = scmp.eq.s32.totalorder %s12, 1
    %p65 = scmp.ne.s32.totalorder %s60, %s62
    %p66 = scmp.eq.s32.totalorder %s12, 0
    %p67 = por %p65, %p66
    %p68 = scmp.ne.s32.totalorder %s60, %s62
    %p69 = scmp.eq.s32.totalorder %s17, 1
    %p70 = por %p68, %p69
    %p71 = scmp.ne.s32.totalorder %s62, %s63
    %p72 = scmp.eq.s32.totalorder %s17, 0
    %p73 = por %p71, %p72
    %p74 = scmp.ne.s32.totalorder %s62, %s63
    %p75 = scmp.eq.s32.totalorder %s18, 1
    %p76 = por %p74, %p75
    %p78 = scmp.ne.s32.totalorder %s63, %s77
    %p79 = scmp.eq.s32.totalorder %s18, 0
    %p80 = por %p78, %p79
    %s82 = sadd.s32 %s81, 1
    %p85 = scmp.eq.s32.totalorder %s12, 1
    %p86 = scmp.ne.s32.totalorder %s81, %s83
    %p87 = scmp.eq.s32.totalorder %s12, 0
    %p88 = por %p86, %p87
    %p89 = scmp.ne.s32.totalorder %s81, %s83
    %p90 = scmp.eq.s32.totalorder %s17, 1
    %p91 = por %p89, %p90
    %p92 = scmp.ne.s32.totalorder %s83, %s84
    %p93 = scmp.eq.s32.totalorder %s17, 0
    %p94 = por %p92, %p93
    %p95 = scmp.ne.s32.totalorder %s83, %s84
    %p96 = scmp.eq.s32.totalorder %s18, 1
    %p97 = por %p95, %p96
    %p99 = scmp.ne.s32.totalorder %s84, %s98
    %p100 = scmp.eq.s32.totalorder %s18, 0
    %p101 = por %p99, %p100
    %s103 = sadd.s32 %s102, 1
    %p106 = scmp.eq.s32.totalorder %s12, 1
    %p107 = scmp.ne.s32.totalorder %s102, %s104
    %p108 = scmp.eq.s32.totalorder %s12, 0
    %p109 = por %p107, %p108
    %p110 = scmp.ne.s32.totalorder %s102, %s104
    %p111 = scmp.eq.s32.totalorder %s17, 1
    %p112 = por %p110, %p111
    %p113 = scmp.ne.s32.totalorder %s104, %s105
    %p114 = scmp.eq.s32.totalorder %s17, 0
    %p115 = por %p113, %p114
    %p116 = scmp.ne.s32.totalorder %s104, %s105
    %p117 = scmp.eq.s32.totalorder %s18, 1
    %p118 = por %p116, %p117
    %p120 = scmp.ne.s32.totalorder %s105, %s119
    %p121 = scmp.eq.s32.totalorder %s18, 0
    %p122 = por %p120, %p121
    %s123 = ssub.s32 %s19, %s31
    %s124 = ssub.s32 %s20, %s27
    %s125 = sor.u32 %s123, %s124
    %p126 = scmp.eq.s32.totalorder %s125, 0
    %s128 = sadd.s32 %s127, 1
    %s129 = scalar_select %p126, %s127, %s128
    %p132 = pneg %p126
    %p133 = scmp.eq.s32.totalorder %s12, 1
    %p134 = por %p132, %p133
    %p135 = scmp.ne.s32.totalorder %s127, %s130
    %p136 = scmp.eq.s32.totalorder %s12, 0
    %p137 = por %p135, %p136
    %p138 = scmp.ne.s32.totalorder %s127, %s130
    %p139 = scmp.eq.s32.totalorder %s17, 1
    %p140 = por %p138, %p139
    %p141 = scmp.ne.s32.totalorder %s130, %s131
    %p142 = scmp.eq.s32.totalorder %s17, 0
    %p143 = por %p141, %p142
    %p144 = scmp.ne.s32.totalorder %s130, %s131
    %p145 = scmp.eq.s32.totalorder %s18, 1
    %p146 = por %p144, %p145
    %p148 = scmp.ne.s32.totalorder %s131, %s147
    %p149 = scmp.eq.s32.totalorder %s18, 0
    %p150 = por %p148, %p149
    %s151 = ssub.s32 %s19, %s31
    %s152 = ssub.s32 %s20, %s27
    %s153 = sor.u32 %s151, %s152
    %p154 = scmp.eq.s32.totalorder %s153, 0
    %s156 = sadd.s32 %s155, 1
    %s157 = scalar_select %p154, %s155, %s156
    %p160 = pneg %p154
    %p161 = scmp.eq.s32.totalorder %s12, 1
    %p162 = por %p160, %p161
    %p163 = scmp.ne.s32.totalorder %s155, %s158
    %p164 = scmp.eq.s32.totalorder %s12, 0
    %p165 = por %p163, %p164
    %p166 = scmp.ne.s32.totalorder %s155, %s158
    %p167 = scmp.eq.s32.totalorder %s17, 1
    %p168 = por %p166, %p167
    %p169 = scmp.ne.s32.totalorder %s158, %s159
    %p170 = scmp.eq.s32.totalorder %s17, 0
    %p171 = por %p169, %p170
    %p172 = scmp.ne.s32.totalorder %s158, %s159
    %p173 = scmp.eq.s32.totalorder %s18, 1
    %p174 = por %p172, %p173
    %p176 = scmp.ne.s32.totalorder %s159, %s175
    %p177 = scmp.eq.s32.totalorder %s18, 0
    %p178 = por %p176, %p177
    %p179 = scmp.le.s32.totalorder 1, %s12
    %p180 = scmp.lt.s32.totalorder %s12, 3
    %p181 = pnand %p179, %p180
    %p182 = pneg %p181
    // Predicated region
    $region9: #{tpu_custom_call.1} parent=5 // pred_check
      _
    $region10: #{tpu_custom_call.1} parent=5 // pred_check_branch
      %184 = sbr.rel (%p181) target = $region12
    $region11: #{tpu_custom_call.1} parent=5 // pred_region
      %s185 = ssub.s32 %s12, 1
      // Predicated region
      $region13: #{tpu_custom_call.1} parent=11 // pred_check
        %p186 = pneg %p73
      $region14: #{tpu_custom_call.1} parent=11 // pred_check_branch
        %188 = sbr.rel (%p186) target = $region16
      $region15: #{tpu_custom_call.1} parent=11 // pred_region
        _
      $region16: #{tpu_custom_call.1} parent=11 // pred_fallthru
        _
      // Predicated region
      $region17: #{tpu_custom_call.1} parent=11 // pred_check
        %p189 = pneg %p94
      $region18: #{tpu_custom_call.1} parent=11 // pred_check_branch
        %191 = sbr.rel (%p189) target = $region20
      $region19: #{tpu_custom_call.1} parent=11 // pred_region
        _
      $region20: #{tpu_custom_call.1} parent=11 // pred_fallthru
        _
      // Predicated region
      $region21: #{tpu_custom_call.1} parent=11 // pred_check
        %p192 = pneg %p115
      $region22: #{tpu_custom_call.1} parent=11 // pred_check_branch
        %194 = sbr.rel (%p192) target = $region24
      $region23: #{tpu_custom_call.1} parent=11 // pred_region
        _
      $region24: #{tpu_custom_call.1} parent=11 // pred_fallthru
        _
    $region12: #{tpu_custom_call.1} parent=5 // pred_fallthru
      _
    %p195 = scmp.lt.s32.totalorder %s12, 2
    // Predicated region
    $region25: #{tpu_custom_call.1} parent=5 // pred_check
      %p196 = pneg %p195
    $region26: #{tpu_custom_call.1} parent=5 // pred_check_branch
      %198 = sbr.rel (%p196) target = $region28
    $region27: #{tpu_custom_call.1} parent=5 // pred_region
      // Predicated region
      $region29: #{tpu_custom_call.1} parent=27 // pred_check
        %p199 = pneg %p46
      $region30: #{tpu_custom_call.1} parent=27 // pred_check_branch
        %201 = sbr.rel (%p199) target = $region32
      $region31: #{tpu_custom_call.1} parent=27 // pred_region
        %p202 = scmp.lt.s32.totalorder %s19, 1
        %s203 = scalar_select %p202, %s19, 1
        %p204 = scmp.lt.s32.totalorder %s20, 0
        %s205 = scalar_select %p204, %s20, 0
        %s206 = smul.addr %s203, 2
        %s207 = sadd.s32 %s205, %s206
        %s208 = smul.addr %s207, 8
        %s209 = scalar_lea.vmem %s0, %s208
      $region32: #{tpu_custom_call.1} parent=27 // pred_fallthru
        _
    $region28: #{tpu_custom_call.1} parent=5 // pred_fallthru
      _
    %p210 = scmp.le.s32.totalorder 1, %s12
    %p211 = scmp.lt.s32.totalorder %s12, 3
    %p212 = pnand %p210, %p211
    %p213 = pneg %p212
    // Predicated region
    $region33: #{tpu_custom_call.1} parent=5 // pred_check
      _
    $region34: #{tpu_custom_call.1} parent=5 // pred_check_branch
      %215 = sbr.rel (%p212) target = $region36
    $region35: #{tpu_custom_call.1} parent=5 // pred_region
      %s216 = ssub.s32 %s12, 1
      %p217 = scmp.lt.s32.totalorder %s21, 1
      %s218 = scalar_select %p217, %s21, 1
      %p219 = scmp.lt.s32.totalorder %s22, 0
      %s220 = scalar_select %p219, %s22, 0
      %s221 = smul.addr %s218, 2
      %s222 = sadd.s32 %s220, %s221
      %s223 = smul.addr %s222, 8
      %s224 = scalar_lea.vmem %s0, %s223
      %p225 = pneg %p52
      %p226 = pneg %p49
      %p227 = pneg %p73
      %p228 = pneg %p70
      %p229 = pneg %p94
      %p230 = pneg %p91
      %p231 = pneg %p115
      %p232 = pneg %p112
      %p233 = pneg %p143
      %p234 = pneg %p140
      %p235 = scmp.lt.s32.totalorder %s21, 1
      %s236 = scalar_select %p235, %s21, 1
      %p237 = scmp.lt.s32.totalorder %s22, 0
      %s238 = scalar_select %p237, %s22, 0
      %s239 = smul.addr %s236, 8
      %s240 = sadd.s32 %s238, %s239
      %s241 = smul.addr %s240, 4
      %s242 = scalar_lea.vmem %s4, %s241
      %p243 = pneg %p171
      %p244 = pneg %p168
      %p245 = scmp.lt.s32.totalorder %s21, 1
      %s246 = scalar_select %p245, %s21, 1
      %p247 = scmp.lt.s32.totalorder %s22, 0
      %s248 = scalar_select %p247, %s22, 0
      %s249 = smul.addr %s246, 8
      %s250 = sadd.s32 %s248, %s249
      %s251 = smul.addr %s250, 8
      %s252 = scalar_lea.vmem %s5, %s251
      %p253 = scmp.lt.s32.totalorder %s21, 1
      %s254 = scalar_select %p253, %s21, 1
      %p255 = scmp.lt.s32.totalorder %s22, 0
      %s256 = scalar_select %p255, %s22, 0
      %s257 = smul.addr %s254, 2
      %s258 = sadd.s32 %s256, %s257
      %s259 = smul.addr %s258, 8
      %s260 = scalar_lea.vmem %s0, %s259
      %p261 = scmp.lt.s32.totalorder %s21, 1
      %s262 = scalar_select %p261, %s21, 1
      %p263 = scmp.lt.s32.totalorder %s22, 0
      %s264 = scalar_select %p263, %s22, 0
      %s265 = smul.addr %s262, 8
      %s266 = sadd.s32 %s264, %s265
      %s267 = smul.addr %s266, 4
      %s268 = scalar_lea.vmem %s4, %s267
      %p269 = scmp.lt.s32.totalorder %s21, 1
      %s270 = scalar_select %p269, %s21, 1
      %p271 = scmp.lt.s32.totalorder %s22, 0
      %s272 = scalar_select %p271, %s22, 0
      %s273 = smul.addr %s270, 8
      %s274 = sadd.s32 %s272, %s273
      %s275 = smul.addr %s274, 8
      %s276 = scalar_lea.vmem %s5, %s275
      %v278 = vld [vmem:[%s260] sm:$0xff]
      %v279 = vld [vmem:[%s260 + $0x8] sm:$0xff]
      %v280 = vpack.c.bf16 %v279, %v278
      %v281 = vld [vmem:[%s1] sm:$0xf]
      %v282 = vld [vmem:[%s1 + $0x4] sm:$0xf]
      %v283 = vld [vmem:[%s1 + $0x8] sm:$0xf]
      %v284 = vld [vmem:[%s1 + $0xc] sm:$0xf]
      %v285 = vld [vmem:[%s1 + $0x10] sm:$0xf]
      %v286 = vld [vmem:[%s1 + $0x14] sm:$0xf]
      %v287 = vld [vmem:[%s1 + $0x18] sm:$0xf]
      %v288 = vld [vmem:[%s1 + $0x1c] sm:$0x3]
      %v289 = vld [vmem:[%s2] sm:$0xff]
      %v290 = vld [vmem:[%s2 + $0x8] sm:$0xff]
      %v291 = vld [vmem:[%s2 + $0x10] sm:$0xff]
      %v292 = vld [vmem:[%s2 + $0x18] sm:$0xff]
      %v293 = vld [vmem:[%s2 + $0x20] sm:$0xff]
      %v294 = vld [vmem:[%s2 + $0x28] sm:$0xff]
      %v295 = vld [vmem:[%s2 + $0x30] sm:$0xff]
      %v296 = vld [vmem:[%s2 + $0x38] sm:$0xf]
      %298 = vset.pattern.permute.xlu0 0
      %299 = vperm.xlu0 %298, %v289
      %v300 = vpop.permute.xlu0 %299
      %303 = vset.pattern.permute.xlu0 0
      %304 = vperm.xlu0 %303, %v290
      %v305 = vpop.permute.xlu0 %304
      %308 = vset.pattern.permute.xlu0 0
      %309 = vperm.xlu0 %308, %v291
      %v310 = vpop.permute.xlu0 %309
      %313 = vset.pattern.permute.xlu0 0
      %314 = vperm.xlu0 %313, %v292
      %v315 = vpop.permute.xlu0 %314
      %318 = vset.pattern.permute.xlu0 0
      %319 = vperm.xlu0 %318, %v293
      %v320 = vpop.permute.xlu0 %319
      %323 = vset.pattern.permute.xlu0 0
      %324 = vperm.xlu0 %323, %v294
      %v325 = vpop.permute.xlu0 %324
      %328 = vset.pattern.permute.xlu0 0
      %329 = vperm.xlu0 %328, %v295
      %v330 = vpop.permute.xlu0 %329
      %333 = vset.pattern.permute.xlu0 0
      %334 = vperm.xlu0 %333, %v296
      %v335 = vpop.permute.xlu0 %334
      %v345 = vunpack.c.l.b16 %v281
      %v346 = vunpack.c.l.b16 %v282
      %v347 = vunpack.c.l.b16 %v283
      %v348 = vunpack.c.l.b16 %v284
      %v349 = vunpack.c.l.b16 %v285
      %v350 = vunpack.c.l.b16 %v286
      %v351 = vunpack.c.l.b16 %v287
      %v352 = vunpack.c.l.b16 %v288
      %v353 = vpack.c.b16 %v346, %v345
      %v354 = vpack.c.b16 %v348, %v347
      %v355 = vpack.c.b16 %v350, %v349
      %v356 = vpack.c.b16 %v352, %v351
      %vm357 = vcmask 130048
      %v359 = vsel %vm357, %v353, 0
      %v362 = vsel %vm357, %v354, 0
      %v365 = vsel %vm357, %v355, 0
      %v368 = vsel %vm357, %v356, 0
      %370 = vmatprep.subr.bf16.mxu0 0
      %371 = vmatpush1.bf16.msra.mxu0 %v280
      %372 = vmatprep.subr.bf16.mxu0 0
      %373 = vmatpush1.bf16.msra.mxu0 0
      %374 = vmatprep.subr.bf16.mxu0 0
      %375 = vmatpush1.bf16.msra.mxu0 0
      %376 = vmatprep.subr.bf16.mxu0 0
      %377 = vmatpush1.bf16.msra.mxu0 0
      %378 = vmatprep.subr.bf16.mxu0 0
      %379 = vmatpush1.bf16.msra.mxu0 0
      %380 = vmatprep.subr.bf16.mxu0 0
      %381 = vmatpush1.bf16.msra.mxu0 0
      %382 = vmatprep.subr.bf16.mxu0 0
      %383 = vmatpush1.bf16.msra.mxu0 0
      %384 = vmatprep.subr.bf16.mxu0 0
      %385 = vmatpush1.bf16.msra.mxu0 0
      %386 = vmatprep.subr.bf16.mxu0 0
      %387 = vmatpush1.bf16.msra.mxu0 0
      %388 = vmatprep.subr.bf16.mxu0 0
      %389 = vmatpush1.bf16.msra.mxu0 0
      %390 = vmatprep.subr.bf16.mxu0 0
      %391 = vmatpush1.bf16.msra.mxu0 0
      %392 = vmatprep.subr.bf16.mxu0 0
      %393 = vmatpush1.bf16.msra.mxu0 0
      %394 = vmatprep.subr.bf16.mxu0 0
      %395 = vmatpush1.bf16.msra.mxu0 0
      %396 = vmatprep.subr.bf16.mxu0 0
      %397 = vmatpush1.bf16.msra.mxu0 0
      %398 = vmatprep.subr.bf16.mxu0 0
      %399 = vmatpush1.bf16.msra.mxu0 0
      %400 = vmatprep.subr.bf16.mxu0 0
      %401 = vmatpush1.bf16.msra.mxu0 0
      %402 = vmatprep.mubr.bf16.mxu0 0
      %403 = vmatmul.mubr.bf16.gmra.mrb[0].mxu0 %v359
      %v404 = vpop.f32.mrb[0].mxu0
      %v405 = vadd.f32 %v300, %v404
      %v406 = vpop.f32.mrb[0].mxu0
      %v407 = vpop.f32.mrb[0].mxu0
      %v408 = vadd.f32 %v305, %v407
      %v409 = vpop.f32.mrb[0].mxu0
      %410 = vmatprep.mubr.bf16.mxu0 0
      %411 = vmatmul.mubr.bf16.gmra.mrb[0].mxu0 %v362
      %v412 = vpop.f32.mrb[0].mxu0
      %v413 = vadd.f32 %v310, %v412
      %v414 = vpop.f32.mrb[0].mxu0
      %v415 = vpop.f32.mrb[0].mxu0
      %v416 = vadd.f32 %v315, %v415
      %v417 = vpop.f32.mrb[0].mxu0
      %418 = vmatprep.mubr.bf16.mxu0 0
      %419 = vmatmul.mubr.bf16.gmra.mrb[0].mxu0 %v365
      %v420 = vpop.f32.mrb[0].mxu0
      %v421 = vadd.f32 %v320, %v420
      %v422 = vpop.f32.mrb[0].mxu0
      %v423 = vpop.f32.mrb[0].mxu0
      %v424 = vadd.f32 %v325, %v423
      %v425 = vpop.f32.mrb[0].mxu0
      %426 = vmatprep.mubr.bf16.mxu0 0
      %427 = vmatmul.mubr.bf16.gmra.mrb[0].mxu0 %v368
      %v428 = vpop.f32.mrb[0].mxu0
      %v429 = vadd.f32 %v330, %v428
      %v430 = vpop.f32.mrb[0].mxu0
      %v431 = vpop.f32.mrb[0].mxu0
      %v432 = vadd.f32 %v335, %v431
      %v433 = vpop.f32.mrb[0].mxu0
      %434 = vdwg.mxu0
      %v435 = vpack.c.bf16 %v408, %v405
      %v436 = vpack.c.bf16 %v416, %v413
      %v437 = vpack.c.bf16 %v424, %v421
      %v438 = vpack.c.bf16 %v432, %v429
      %v443 = vunpack.c.l.b16 %v435
      %v444 = vunpack.c.h.b16 %v435
      %v445 = vunpack.c.l.b16 %v436
      %v446 = vunpack.c.h.b16 %v436
      %v447 = vunpack.c.l.b16 %v437
      %v448 = vunpack.c.h.b16 %v437
      %v449 = vunpack.c.l.b16 %v438
      %v450 = vunpack.c.h.b16 %v438
      %v451 = vpack.c.b16 %v443, %v443
      %v452 = vpack.c.b16 %v444, %v444
      %v453 = vpack.c.b16 %v445, %v445
      %v454 = vpack.c.b16 %v446, %v446
      %v455 = vpack.c.b16 %v447, %v447
      %v456 = vpack.c.b16 %v448, %v448
      %v457 = vpack.c.b16 %v449, %v449
      %v458 = vpack.c.b16 %v450, %v450
      %vm467 = vcmask 519168
      %468 = vst.msk [vmem:[%s268] sm:$0xf] %vm467, %v451
      %469 = vst.msk [vmem:[%s268 + $0x4] sm:$0xf] %vm467, %v452
      %470 = vst.msk [vmem:[%s268 + $0x8] sm:$0xf] %vm467, %v453
      %471 = vst.msk [vmem:[%s268 + $0xc] sm:$0xf] %vm467, %v454
      %472 = vst.msk [vmem:[%s268 + $0x10] sm:$0xf] %vm467, %v455
      %473 = vst.msk [vmem:[%s268 + $0x14] sm:$0xf] %vm467, %v456
      %474 = vst.msk [vmem:[%s268 + $0x18] sm:$0xf] %vm467, %v457
      %vm475 = vcmask 517120
      %476 = vst.msk [vmem:[%s268 + $0x1c] sm:$0x3] %vm475, %v458
      %s477 = smul.u32 %s22, 64
      %v478 = vlaneseq
      %v479 = vand.u32 %v478, 127
      %v480 = vstv %s477
      %v481 = vadd.s32 %v480, %v479
      %v482 = vcvt.s32.f32 %v481
      %v483 = vadd.f32 %v482, 0.5
      %v484 = vrcp.pop 8.0
      %v485 = vmul.f32 %v483, %v484
      %v486 = vfloor.f32 %v485
      %v487 = vmul.f32 %v486, 8.0
      %v488 = vsub.f32 %v482, %v487
      %v489 = vsub.f32 %v488, 0.5
      %v490 = vsub.f32 %v486, 0.5
      %v491 = vxor.u32 %v405, 2147483648
      %v492 = vxor.u32 %v408, 2147483648
      %v493 = vxor.u32 %v413, 2147483648
      %v494 = vxor.u32 %v416, 2147483648
      %v495 = vxor.u32 %v421, 2147483648
      %v496 = vxor.u32 %v424, 2147483648
      %v497 = vxor.u32 %v429, 2147483648
      %v498 = vxor.u32 %v432, 2147483648
      %v499 = vmul.f32 %v491, 1.442695
      %v500 = vpow.pop %v499
      %v501 = vmul.f32 %v492, 1.442695
      %v502 = vpow.pop %v501
      %v503 = vmul.f32 %v493, 1.442695
      %v504 = vpow.pop %v503
      %v505 = vmul.f32 %v494, 1.442695
      %v506 = vpow.pop %v505
      %v507 = vmul.f32 %v495, 1.442695
      %v508 = vpow.pop %v507
      %v509 = vmul.f32 %v496, 1.442695
      %v510 = vpow.pop %v509
      %v511 = vmul.f32 %v497, 1.442695
      %v512 = vpow.pop %v511
      %v513 = vmul.f32 %v498, 1.442695
      %v514 = vpow.pop %v513
      %v515 = vadd.f32 %v500, 1.0
      %v516 = vadd.f32 %v502, 1.0
      %v517 = vadd.f32 %v504, 1.0
      %v518 = vadd.f32 %v506, 1.0
      %v519 = vadd.f32 %v508, 1.0
      %v520 = vadd.f32 %v510, 1.0
      %v521 = vadd.f32 %v512, 1.0
      %v522 = vadd.f32 %v514, 1.0
      %v523 = vrcp.pop %v515
      %v524 = vmul.f32 1.0, %v523
      %v525 = vrcp.pop %v516
      %v526 = vmul.f32 1.0, %v525
      %v527 = vrcp.pop %v517
      %v528 = vmul.f32 1.0, %v527
      %v529 = vrcp.pop %v518
      %v530 = vmul.f32 1.0, %v529
      %v531 = vrcp.pop %v519
      %v532 = vmul.f32 1.0, %v531
      %v533 = vrcp.pop %v520
      %v534 = vmul.f32 1.0, %v533
      %v535 = vrcp.pop %v521
      %v536 = vmul.f32 1.0, %v535
      %v537 = vrcp.pop %v522
      %v538 = vmul.f32 1.0, %v537
      %v539 = vld [vmem:[%s3] sm:$0xff]
      %v540 = vld [vmem:[%s3 + $0x8] sm:$0xff]
      %v541 = vld [vmem:[%s3 + $0x10] sm:$0xff]
      %v542 = vld [vmem:[%s3 + $0x18] sm:$0xff]
      %v543 = vld [vmem:[%s3 + $0x20] sm:$0xff]
      %v544 = vld [vmem:[%s3 + $0x28] sm:$0xff]
      %v545 = vld [vmem:[%s3 + $0x30] sm:$0xff]
      %v546 = vld [vmem:[%s3 + $0x38] sm:$0xf]
      %v547 = vmul.f32 %v524, 2.0
      %v548 = vmul.f32 %v526, 2.0
      %v549 = vmul.f32 %v528, 2.0
      %v550 = vmul.f32 %v530, 2.0
      %v551 = vmul.f32 %v532, 2.0
      %v552 = vmul.f32 %v534, 2.0
      %v553 = vmul.f32 %v536, 2.0
      %v554 = vmul.f32 %v538, 2.0
      %556 = vset.pattern.permute.xlu0 0
      %557 = vperm.xlu0 %556, %v539
      %v558 = vpop.permute.xlu0 %557
      %561 = vset.pattern.permute.xlu0 0
      %562 = vperm.xlu0 %561, %v540
      %v563 = vpop.permute.xlu0 %562
      %566 = vset.pattern.permute.xlu0 0
      %567 = vperm.xlu0 %566, %v541
      %v568 = vpop.permute.xlu0 %567
      %571 = vset.pattern.permute.xlu0 0
      %572 = vperm.xlu0 %571, %v542
      %v573 = vpop.permute.xlu0 %572
      %576 = vset.pattern.permute.xlu0 0
      %577 = vperm.xlu0 %576, %v543
      %v578 = vpop.permute.xlu0 %577
      %581 = vset.pattern.permute.xlu0 0
      %582 = vperm.xlu0 %581, %v544
      %v583 = vpop.permute.xlu0 %582
      %586 = vset.pattern.permute.xlu0 0
      %587 = vperm.xlu0 %586, %v545
      %v588 = vpop.permute.xlu0 %587
      %591 = vset.pattern.permute.xlu0 0
      %592 = vperm.xlu0 %591, %v546
      %v593 = vpop.permute.xlu0 %592
      %v595 = vmul.f32 %v489, %v558
      %v596 = vmul.f32 %v489, %v563
      %v597 = vmul.f32 %v489, %v568
      %v598 = vmul.f32 %v489, %v573
      %v599 = vmul.f32 %v489, %v578
      %v600 = vmul.f32 %v489, %v583
      %v601 = vmul.f32 %v489, %v588
      %v602 = vmul.f32 %v489, %v593
      %v603 = vadd.f32 %v547, %v595
      %v604 = vadd.f32 %v548, %v596
      %v605 = vadd.f32 %v549, %v597
      %v606 = vadd.f32 %v550, %v598
      %v607 = vadd.f32 %v551, %v599
      %v608 = vadd.f32 %v552, %v600
      %v609 = vadd.f32 %v553, %v601
      %v610 = vadd.f32 %v554, %v602
      %611 = vset.pattern.permute.xlu0 1
      %612 = vperm.xlu0 %611, %v539
      %v613 = vpop.permute.xlu0 %612
      %615 = vset.pattern.permute.xlu0 1
      %616 = vperm.xlu0 %615, %v540
      %v617 = vpop.permute.xlu0 %616
      %619 = vset.pattern.permute.xlu0 1
      %620 = vperm.xlu0 %619, %v541
      %v621 = vpop.permute.xlu0 %620
      %623 = vset.pattern.permute.xlu0 1
      %624 = vperm.xlu0 %623, %v542
      %v625 = vpop.permute.xlu0 %624
      %627 = vset.pattern.permute.xlu0 1
      %628 = vperm.xlu0 %627, %v543
      %v629 = vpop.permute.xlu0 %628
      %631 = vset.pattern.permute.xlu0 1
      %632 = vperm.xlu0 %631, %v544
      %v633 = vpop.permute.xlu0 %632
      %635 = vset.pattern.permute.xlu0 1
      %636 = vperm.xlu0 %635, %v545
      %v637 = vpop.permute.xlu0 %636
      %639 = vset.pattern.permute.xlu0 1
      %640 = vperm.xlu0 %639, %v546
      %v641 = vpop.permute.xlu0 %640
      %v643 = vmul.f32 %v490, %v613
      %v644 = vmul.f32 %v490, %v617
      %v645 = vmul.f32 %v490, %v621
      %v646 = vmul.f32 %v490, %v625
      %v647 = vmul.f32 %v490, %v629
      %v648 = vmul.f32 %v490, %v633
      %v649 = vmul.f32 %v490, %v637
      %v650 = vmul.f32 %v490, %v641
      %v651 = vadd.f32 %v603, %v643
      %v652 = vadd.f32 %v604, %v644
      %v653 = vadd.f32 %v605, %v645
      %v654 = vadd.f32 %v606, %v646
      %v655 = vadd.f32 %v607, %v647
      %v656 = vadd.f32 %v608, %v648
      %v657 = vadd.f32 %v609, %v649
      %v658 = vadd.f32 %v610, %v650
      %v659 = vmul.f32 %v651, 8.0
      %v660 = vmul.f32 %v652, 8.0
      %v661 = vmul.f32 %v653, 8.0
      %v662 = vmul.f32 %v654, 8.0
      %v663 = vmul.f32 %v655, 8.0
      %v664 = vmul.f32 %v656, 8.0
      %v665 = vmul.f32 %v657, 8.0
      %v666 = vmul.f32 %v658, 8.0
      %v667 = vmul.f32 %v547, %v547
      %v668 = vmul.f32 %v548, %v548
      %v669 = vmul.f32 %v549, %v549
      %v670 = vmul.f32 %v550, %v550
      %v671 = vmul.f32 %v551, %v551
      %v672 = vmul.f32 %v552, %v552
      %v673 = vmul.f32 %v553, %v553
      %v674 = vmul.f32 %v554, %v554
      %675 = vset.pattern.permute.xlu0 4
      %676 = vperm.xlu0 %675, %v539
      %v677 = vpop.permute.xlu0 %676
      %679 = vset.pattern.permute.xlu0 4
      %680 = vperm.xlu0 %679, %v540
      %v681 = vpop.permute.xlu0 %680
      %683 = vset.pattern.permute.xlu0 4
      %684 = vperm.xlu0 %683, %v541
      %v685 = vpop.permute.xlu0 %684
      %687 = vset.pattern.permute.xlu0 4
      %688 = vperm.xlu0 %687, %v542
      %v689 = vpop.permute.xlu0 %688
      %691 = vset.pattern.permute.xlu0 4
      %692 = vperm.xlu0 %691, %v543
      %v693 = vpop.permute.xlu0 %692
      %695 = vset.pattern.permute.xlu0 4
      %696 = vperm.xlu0 %695, %v544
      %v697 = vpop.permute.xlu0 %696
      %699 = vset.pattern.permute.xlu0 4
      %700 = vperm.xlu0 %699, %v545
      %v701 = vpop.permute.xlu0 %700
      %703 = vset.pattern.permute.xlu0 4
      %704 = vperm.xlu0 %703, %v546
      %v705 = vpop.permute.xlu0 %704
      %v707 = vmul.f32 %v667, %v677
      %v708 = vmul.f32 %v668, %v681
      %v709 = vmul.f32 %v669, %v685
      %v710 = vmul.f32 %v670, %v689
      %v711 = vmul.f32 %v671, %v693
      %v712 = vmul.f32 %v672, %v697
      %v713 = vmul.f32 %v673, %v701
      %v714 = vmul.f32 %v674, %v705
      %715 = vset.pattern.permute.xlu0 2
      %716 = vperm.xlu0 %715, %v539
      %v717 = vpop.permute.xlu0 %716
      %719 = vset.pattern.permute.xlu0 2
      %720 = vperm.xlu0 %719, %v540
      %v721 = vpop.permute.xlu0 %720
      %723 = vset.pattern.permute.xlu0 2
      %724 = vperm.xlu0 %723, %v541
      %v725 = vpop.permute.xlu0 %724
      %727 = vset.pattern.permute.xlu0 2
      %728 = vperm.xlu0 %727, %v542
      %v729 = vpop.permute.xlu0 %728
      %731 = vset.pattern.permute.xlu0 2
      %732 = vperm.xlu0 %731, %v543
      %v733 = vpop.permute.xlu0 %732
      %735 = vset.pattern.permute.xlu0 2
      %736 = vperm.xlu0 %735, %v544
      %v737 = vpop.permute.xlu0 %736
      %739 = vset.pattern.permute.xlu0 2
      %740 = vperm.xlu0 %739, %v545
      %v741 = vpop.permute.xlu0 %740
      %743 = vset.pattern.permute.xlu0 2
      %744 = vperm.xlu0 %743, %v546
      %v745 = vpop.permute.xlu0 %744
      %v747 = vmul.f32 %v717, %v659
      %v748 = vmul.f32 %v721, %v660
      %v749 = vmul.f32 %v725, %v661
      %v750 = vmul.f32 %v729, %v662
      %v751 = vmul.f32 %v733, %v663
      %v752 = vmul.f32 %v737, %v664
      %v753 = vmul.f32 %v741, %v665
      %v754 = vmul.f32 %v745, %v666
      %755 = vset.pattern.permute.xlu0 3
      %756 = vperm.xlu0 %755, %v539
      %v757 = vpop.permute.xlu0 %756
      %759 = vset.pattern.permute.xlu0 3
      %760 = vperm.xlu0 %759, %v540
      %v761 = vpop.permute.xlu0 %760
      %763 = vset.pattern.permute.xlu0 3
      %764 = vperm.xlu0 %763, %v541
      %v765 = vpop.permute.xlu0 %764
      %767 = vset.pattern.permute.xlu0 3
      %768 = vperm.xlu0 %767, %v542
      %v769 = vpop.permute.xlu0 %768
      %771 = vset.pattern.permute.xlu0 3
      %772 = vperm.xlu0 %771, %v543
      %v773 = vpop.permute.xlu0 %772
      %775 = vset.pattern.permute.xlu0 3
      %776 = vperm.xlu0 %775, %v544
      %v777 = vpop.permute.xlu0 %776
      %779 = vset.pattern.permute.xlu0 3
      %780 = vperm.xlu0 %779, %v545
      %v781 = vpop.permute.xlu0 %780
      %783 = vset.pattern.permute.xlu0 3
      %784 = vperm.xlu0 %783, %v546
      %v785 = vpop.permute.xlu0 %784
      %v787 = vmul.f32 %v757, %v707
      %v788 = vmul.f32 %v761, %v708
      %v789 = vmul.f32 %v765, %v709
      %v790 = vmul.f32 %v769, %v710
      %v791 = vmul.f32 %v773, %v711
      %v792 = vmul.f32 %v777, %v712
      %v793 = vmul.f32 %v781, %v713
      %v794 = vmul.f32 %v785, %v714
      %v795 = vadd.f32 %v747, %v787
      %v796 = vadd.f32 %v748, %v788
      %v797 = vadd.f32 %v749, %v789
      %v798 = vadd.f32 %v750, %v790
      %v799 = vadd.f32 %v751, %v791
      %v800 = vadd.f32 %v752, %v792
      %v801 = vadd.f32 %v753, %v793
      %v802 = vadd.f32 %v754, %v794
      %v803 = vsub.f32 1.0, %v539
      %v804 = vsub.f32 1.0, %v540
      %v805 = vsub.f32 1.0, %v541
      %v806 = vsub.f32 1.0, %v542
      %v807 = vsub.f32 1.0, %v543
      %v808 = vsub.f32 1.0, %v544
      %v809 = vsub.f32 1.0, %v545
      %v810 = vsub.f32 1.0, %v546
      %811 = vrot.lane.b32.xlu0 %v539, 127
      %v812 = vpop.permute.xlu0 %811
      %813 = vrot.lane.b32.xlu0 %v540, 127
      %v814 = vpop.permute.xlu0 %813
      %815 = vrot.lane.b32.xlu0 %v541, 127
      %v816 = vpop.permute.xlu0 %815
      %817 = vrot.lane.b32.xlu0 %v542, 127
      %v818 = vpop.permute.xlu0 %817
      %819 = vrot.lane.b32.xlu0 %v543, 127
      %v820 = vpop.permute.xlu0 %819
      %821 = vrot.lane.b32.xlu0 %v544, 127
      %v822 = vpop.permute.xlu0 %821
      %823 = vrot.lane.b32.xlu0 %v545, 127
      %v824 = vpop.permute.xlu0 %823
      %825 = vrot.lane.b32.xlu0 %v546, 127
      %v826 = vpop.permute.xlu0 %825
      %v835 = vsub.f32 %v803, %v812
      %v836 = vsub.f32 %v804, %v814
      %v837 = vsub.f32 %v805, %v816
      %v838 = vsub.f32 %v806, %v818
      %v839 = vsub.f32 %v807, %v820
      %v840 = vsub.f32 %v808, %v822
      %v841 = vsub.f32 %v809, %v824
      %v842 = vsub.f32 %v810, %v826
      %844 = vset.pattern.permute.xlu0 2
      %845 = vperm.xlu0 %844, %v835
      %v846 = vpop.permute.xlu0 %845
      %849 = vset.pattern.permute.xlu0 2
      %850 = vperm.xlu0 %849, %v836
      %v851 = vpop.permute.xlu0 %850
      %854 = vset.pattern.permute.xlu0 2
      %855 = vperm.xlu0 %854, %v837
      %v856 = vpop.permute.xlu0 %855
      %859 = vset.pattern.permute.xlu0 2
      %860 = vperm.xlu0 %859, %v838
      %v861 = vpop.permute.xlu0 %860
      %864 = vset.pattern.permute.xlu0 2
      %865 = vperm.xlu0 %864, %v839
      %v866 = vpop.permute.xlu0 %865
      %869 = vset.pattern.permute.xlu0 2
      %870 = vperm.xlu0 %869, %v840
      %v871 = vpop.permute.xlu0 %870
      %874 = vset.pattern.permute.xlu0 2
      %875 = vperm.xlu0 %874, %v841
      %v876 = vpop.permute.xlu0 %875
      %879 = vset.pattern.permute.xlu0 2
      %880 = vperm.xlu0 %879, %v842
      %v881 = vpop.permute.xlu0 %880
      %v883 = vmul.f32 %v846, %v524
      %v884 = vmul.f32 %v851, %v526
      %v885 = vmul.f32 %v856, %v528
      %v886 = vmul.f32 %v861, %v530
      %v887 = vmul.f32 %v866, %v532
      %v888 = vmul.f32 %v871, %v534
      %v889 = vmul.f32 %v876, %v536
      %v890 = vmul.f32 %v881, %v538
      %v891 = vadd.f32 %v795, %v883
      %v892 = vadd.f32 %v796, %v884
      %v893 = vadd.f32 %v797, %v885
      %v894 = vadd.f32 %v798, %v886
      %v895 = vadd.f32 %v799, %v887
      %v896 = vadd.f32 %v800, %v888
      %v897 = vadd.f32 %v801, %v889
      %v898 = vadd.f32 %v802, %v890
      %vm899 = vcmask 523264
      %900 = vst.msk [vmem:[%s276] sm:$0xff] %vm899, %v891
      %901 = vst.msk [vmem:[%s276 + $0x8] sm:$0xff] %vm899, %v892
      %902 = vst.msk [vmem:[%s276 + $0x10] sm:$0xff] %vm899, %v893
      %903 = vst.msk [vmem:[%s276 + $0x18] sm:$0xff] %vm899, %v894
      %904 = vst.msk [vmem:[%s276 + $0x20] sm:$0xff] %vm899, %v895
      %905 = vst.msk [vmem:[%s276 + $0x28] sm:$0xff] %vm899, %v896
      %906 = vst.msk [vmem:[%s276 + $0x30] sm:$0xff] %vm899, %v897
      %907 = vst.msk [vmem:[%s276 + $0x38] sm:$0xf] %vm467, %v898
      %p908 = scmp.lt.s32.totalorder %s21, 1
      %s909 = scalar_select %p908, %s21, 1
      %p910 = scmp.lt.s32.totalorder %s22, 0
      %s911 = scalar_select %p910, %s22, 0
      %s912 = smul.addr %s909, 8
      %s913 = sadd.s32 %s911, %s912
      %s914 = smul.addr %s913, 4
      %s915 = scalar_lea.vmem %s4, %s914
      %p916 = scmp.lt.s32.totalorder %s21, 1
      %s917 = scalar_select %p916, %s21, 1
      %p918 = scmp.lt.s32.totalorder %s22, 0
      %s919 = scalar_select %p918, %s22, 0
      %s920 = smul.addr %s917, 8
      %s921 = sadd.s32 %s919, %s920
      %s922 = smul.addr %s921, 8
      %s923 = scalar_lea.vmem %s5, %s922
      // Predicated region
      $region37: #{tpu_custom_call.1} parent=35 // pred_check
        %p924 = pneg %p140
      $region38: #{tpu_custom_call.1} parent=35 // pred_check_branch
        %926 = sbr.rel (%p924) target = $region40
      $region39: #{tpu_custom_call.1} parent=35 // pred_region
        _
      $region40: #{tpu_custom_call.1} parent=35 // pred_fallthru
        _
      // Predicated region
      $region41: #{tpu_custom_call.1} parent=35 // pred_check
        %p927 = pneg %p168
      $region42: #{tpu_custom_call.1} parent=35 // pred_check_branch
        %929 = sbr.rel (%p927) target = $region44
      $region43: #{tpu_custom_call.1} parent=35 // pred_region
        _
      $region44: #{tpu_custom_call.1} parent=35 // pred_fallthru
        _
    $region36: #{tpu_custom_call.1} parent=5 // pred_fallthru
      _
    %p930 = scmp.le.s32.totalorder 2, %s12
    // Predicated region
    $region45: #{tpu_custom_call.1} parent=5 // pred_check
      %p931 = pneg %p930
    $region46: #{tpu_custom_call.1} parent=5 // pred_check_branch
      %933 = sbr.rel (%p931) target = $region48
    $region47: #{tpu_custom_call.1} parent=5 // pred_region
      %s934 = ssub.s32 %s12, 2
      // Predicated region
      $region49: #{tpu_custom_call.1} parent=47 // pred_check
        %p935 = pneg %p146
      $region50: #{tpu_custom_call.1} parent=47 // pred_check_branch
        %937 = sbr.rel (%p935) target = $region52
      $region51: #{tpu_custom_call.1} parent=47 // pred_region
        %p938 = scmp.lt.s32.totalorder %s23, 1
        %s939 = scalar_select %p938, %s23, 1
        %p940 = scmp.lt.s32.totalorder %s24, 0
        %s941 = scalar_select %p940, %s24, 0
        %s942 = smul.addr %s939, 8
        %s943 = sadd.s32 %s941, %s942
        %s944 = smul.addr %s943, 4
        %s945 = scalar_lea.vmem %s4, %s944
      $region52: #{tpu_custom_call.1} parent=47 // pred_fallthru
        _
      // Predicated region
      $region53: #{tpu_custom_call.1} parent=47 // pred_check
        %p946 = pneg %p174
      $region54: #{tpu_custom_call.1} parent=47 // pred_check_branch
        %948 = sbr.rel (%p946) target = $region56
      $region55: #{tpu_custom_call.1} parent=47 // pred_region
        %p949 = scmp.lt.s32.totalorder %s23, 1
        %s950 = scalar_select %p949, %s23, 1
        %p951 = scmp.lt.s32.totalorder %s24, 0
        %s952 = scalar_select %p951, %s24, 0
        %s953 = smul.addr %s950, 8
        %s954 = sadd.s32 %s952, %s953
        %s955 = smul.addr %s954, 8
        %s956 = scalar_lea.vmem %s5, %s955
      $region56: #{tpu_custom_call.1} parent=47 // pred_fallthru
        _
    $region48: #{tpu_custom_call.1} parent=5 // pred_fallthru
      _
  $region6: #{tpu_custom_call.1} parent=0 // loop_footer
    %s16 = sadd.s32 1, %s12
  $region7: #{tpu_custom_call.1} parent=0 // loop_footer_branch
    %11 = sbr.rel target = $region3
  $region8: #{tpu_custom_call.1} parent=0 // loop_exit
    _

</llo_original>
